<compile_context>
chip_gen: v5e
topology: v5e:2x2
jax: 0.10.0
libtpu: 0.0.40
codegen_flags: <defaults>
</compile_context>

<pallas_src>
import jax
import jax.numpy as jnp
from jax.experimental import pallas as pl
from jax.experimental.pallas import tpu as pltpu

D_IN = 100
D_OUT = 10
PAD = 128           # lane-dense padded output width
MAX_TB = 512        # batch rows per grid step (512*128*4 = 256 KiB per buffer)


def _linear_kernel(x_ref, w_ref, b_ref, o_ref):
    # One MXU pass on the (TB, 100) x (100, 128) tile + broadcast bias add.
    acc = jnp.dot(x_ref[...], w_ref[...], preferred_element_type=jnp.float32)
    o_ref[...] = (acc + b_ref[...]).astype(o_ref.dtype)


def prepare_params(weight, bias):
    """Pad PyTorch-layout params once (N -> 128 only, K left at 100).

    weight: [D_OUT, D_IN] (PyTorch nn.Linear layout), bias: [D_OUT].
    Returns w_pad [D_IN, PAD] (= W.T zero-padded in N) and b_pad [1, PAD].
    """
    w_t = weight.T.astype(jnp.float32)                       # [100, 10]
    w_pad = jnp.zeros((D_IN, PAD), jnp.float32).at[:, :D_OUT].set(w_t)
    b_pad = jnp.zeros((1, PAD), jnp.float32).at[0, :D_OUT].set(
        bias.astype(jnp.float32))
    return w_pad, b_pad


def output_model_forward(x, w_pad, b_pad):
    """x: [B, 100] f32 (unpadded).  Returns [B, 10] f32 == x @ W.T + b."""
    B = x.shape[0]
    # Batch tile: full extent if small (always a legal block), else 512 rows
    # (multiple of the f32 sublane 8; a partial final block is masked).
    tb = B if B <= MAX_TB else MAX_TB
    grid = (pl.cdiv(B, tb),)

    bytes_accessed = (B * D_IN + D_IN * PAD + PAD + B * PAD) * 4
    flops = 2 * B * D_IN * PAD

    out_pad = pl.pallas_call(
        _linear_kernel,
        out_shape=jax.ShapeDtypeStruct((B, PAD), jnp.float32),
        grid=grid,
        in_specs=[
            pl.BlockSpec((tb, D_IN), lambda i: (i, 0)),     # activation tile
            pl.BlockSpec((D_IN, PAD), lambda i: (0, 0)),    # weight, resident
            pl.BlockSpec((1, PAD), lambda i: (0, 0)),       # bias, resident
        ],
        out_specs=pl.BlockSpec((tb, PAD), lambda i: (i, 0)),
        compiler_params=pltpu.CompilerParams(
            dimension_semantics=("parallel",)),
        cost_estimate=pl.CostEstimate(
            flops=flops, transcendentals=0, bytes_accessed=bytes_accessed),
    )(x, w_pad, b_pad)

    return out_pad[:, :D_OUT]


if __name__ == "__main__":
    key = jax.random.PRNGKey(0)
    k_x, k_w, k_b = jax.random.split(key, 3)

    B = 8

    # Deterministic parameter init mimicking nn.Linear default:
    # U(-1/sqrt(fan_in), 1/sqrt(fan_in)), PyTorch [out, in] layout.
    bound = 1.0 / jnp.sqrt(jnp.float32(D_IN))
    weight = jax.random.uniform(k_w, (D_OUT, D_IN), jnp.float32, -bound, bound)
    bias = jax.random.uniform(k_b, (D_OUT,), jnp.float32, -bound, bound)

    x = jax.random.normal(k_x, (B, D_IN), jnp.float32)

    w_pad, b_pad = prepare_params(weight, bias)

    y = output_model_forward(x, w_pad, b_pad)
    y = jax.block_until_ready(y)

    # Reference check (plain JAX, mirrors F.linear(x, W, b) = x @ W.T + b).
    y_ref = x @ weight.T + bias[None, :]
    assert y.shape == (B, D_OUT)
    assert jnp.allclose(y, y_ref, atol=1e-5, rtol=1e-5)

    print("KERNEL_OK")
</pallas_src>

<mosaic_0001>
module attributes {stable_mosaic.version = 11 : i64} {
  func.func @_linear_kernel(%arg0: i32, %arg1: memref<8x100xf32, #tpu.memory_space<vmem>>, %arg2: memref<100x128xf32, #tpu.memory_space<vmem>>, %arg3: memref<1x128xf32, #tpu.memory_space<vmem>>, %arg4: memref<8x128xf32, #tpu.memory_space<vmem>>) attributes {dimension_semantics = [#tpu.dimension_semantics<parallel>], iteration_bounds = array<i64: 1>, scalar_prefetch = 0 : i64, scratch_operands = 0 : i64, tpu.core_type = #tpu.core_type<tc>, window_params = [{transform_indices = @transform_0, window_bounds = array<i64: 8, 100>}, {pipeline_mode = #tpu.pipeline_mode<synchronous>, transform_indices = @transform_1, window_bounds = array<i64: 100, 128>}, {pipeline_mode = #tpu.pipeline_mode<synchronous>, transform_indices = @transform_2, window_bounds = array<i64: 1, 128>}, {transform_indices = @transform_3, window_bounds = array<i64: 8, 128>}]} {
    %c0 = arith.constant 0 : index
    %c0_0 = arith.constant 0 : index
    %0 = vector.load %arg1[%c0, %c0_0] : memref<8x100xf32, #tpu.memory_space<vmem>>, vector<8x100xf32>
    %c0_1 = arith.constant 0 : index
    %c0_2 = arith.constant 0 : index
    %1 = vector.load %arg2[%c0_1, %c0_2] : memref<100x128xf32, #tpu.memory_space<vmem>>, vector<100x128xf32>
    %cst = arith.constant dense<0.000000e+00> : vector<8x128xf32>
    %2 = tpu.matmul %0, %1, %cst {dimension_numbers = #tpu.dot_dimension_numbers<[1], [0], [0], [1], [0, 0, 1, 1], [], []>} : vector<8x100xf32>, vector<100x128xf32>, vector<8x128xf32> -> vector<8x128xf32>
    %c0_3 = arith.constant 0 : index
    %c0_4 = arith.constant 0 : index
    %3 = vector.load %arg3[%c0_3, %c0_4] : memref<1x128xf32, #tpu.memory_space<vmem>>, vector<1x128xf32>
    %4 = vector.broadcast %3 : vector<1x128xf32> to vector<8x128xf32>
    %5 = arith.addf %2, %4 : vector<8x128xf32>
    %c0_5 = arith.constant 0 : index
    %c0_6 = arith.constant 0 : index
    %6 = vector.load %arg4[%c0_5, %c0_6] : memref<8x128xf32, #tpu.memory_space<vmem>>, vector<8x128xf32>
    tpu.vector_store %arg4[%c0_5, %c0_6], %5 {strides = array<i32>} : memref<8x128xf32, #tpu.memory_space<vmem>>, vector<8x128xf32>,
    return
  }
  func.func @transform_0(%arg0: i32) -> (i32, i32) {
    %c0_i32 = arith.constant 0 : i32
    %c0_i32_0 = arith.constant 0 : i32
    return %arg0, %c0_i32 : i32, i32
  }
  func.func @transform_1(%arg0: i32) -> (i32, i32) {
    %c0_i32 = arith.constant 0 : i32
    %c0_i32_0 = arith.constant 0 : i32
    %c0_i32_1 = arith.constant 0 : i32
    return %c0_i32, %c0_i32_0 : i32, i32
  }
  func.func @transform_2(%arg0: i32) -> (i32, i32) {
    %c0_i32 = arith.constant 0 : i32
    %c0_i32_0 = arith.constant 0 : i32
    %c0_i32_1 = arith.constant 0 : i32
    return %c0_i32, %c0_i32_0 : i32, i32
  }
  func.func @transform_3(%arg0: i32) -> (i32, i32) {
    %c0_i32 = arith.constant 0 : i32
    %c0_i32_0 = arith.constant 0 : i32
    return %arg0, %c0_i32 : i32, i32
  }
}

</mosaic_0001>

<llo_original>
// kernel: tpu_custom_call.1
$region0: #{tpu_custom_call.1}
  #allocation0 [shape = 'u32[]', space=smem, size = 0x4, offset = 0x4, fixed_abs, tag = 'smem constant byte address 0x4 - core index']
  #allocation1 [shape = 'u32[72,128]{1,0:T(1,128)}', space=vmem, size = 0x9000, scoped, tag = 'internal scratch']
  %s0 = inlined_call_operand.hbm [shape: f32[8,100], index: 0, kind: input, shape index: {}]
  %s1 = inlined_call_operand.hbm [shape: f32[100,128], index: 1, kind: input, shape index: {}]
  %s2 = inlined_call_operand.vmem [shape: f32[1,128], index: 2, kind: input, shape index: {}]
  %s3 = inlined_call_operand.hbm [shape: f32[8,128], index: 3, kind: output, shape index: {}]
  %s4 = sld [smem:[#allocation0]]
  $region30: #{tpu_custom_call.1} parent=0
    _
  %s6 = ssub.s32 1, %s4
  %s7 = scalar_select 0, %s6, %s4
  $region1: #{tpu_custom_call.1} parent=0
    #allocation2 [shape = 'u8[4096]{0}', space=vmem, size = 0x1000, scoped, tag = 'input window, operand 0, single buffered']
    #allocation3 [shape = 's32[1]{0}', space=sflag, size = 0x4, scoped, tag = 'scoped memory for tpu_custom_call.1']
    #allocation4 [shape = 's32[1]{0}', space=sflag, size = 0x4, scoped, tag = 'scoped memory for tpu_custom_call.1']
    #allocation5 [shape = 'u8[53248]{0}', space=vmem, size = 0xd000, scoped, tag = 'input window, operand 1, single buffered']
    #allocation6 [shape = 's32[1]{0}', space=sflag, size = 0x4, scoped, tag = 'scoped memory for tpu_custom_call.1']
    #allocation7 [shape = 'u8[4096]{0}', space=vmem, size = 0x1000, scoped, tag = 'output window, operand 0, single buffered']
    %8 = vsyncpa [#allocation3], 0
    %9 = vsyncpa [#allocation6], 0
    %10 = vsyncpa [#allocation4], 0
    // Predicated region
    $region2: #{tpu_custom_call.1} parent=1 // pred_check
      _
    $region3: #{tpu_custom_call.1} parent=1 // pred_check_branch
      %12 = sbr.rel (0) target = $region5
    $region4: #{tpu_custom_call.1} parent=1 // pred_region
      %14 = vsyncadd [#allocation3], 0
      %s16 = sshll.u32 %s0, 4
      %s17 = int_to_ptr.hbm [resolvable:$true] %s16
      %s18 = sshll.u32 [#allocation2], 4
      %s19 = int_to_ptr.vmem [resolvable:$true] %s18
      %21 = dma.hbm_to_vmem [thread:$0]  %s17, 128, %s19, [#allocation3]
    $region5: #{tpu_custom_call.1} parent=1 // pred_fallthru
      _
    // Predicated region
    $region6: #{tpu_custom_call.1} parent=1 // pred_check
      _
    $region7: #{tpu_custom_call.1} parent=1 // pred_check_branch
      %23 = sbr.rel (0) target = $region9
    $region8: #{tpu_custom_call.1} parent=1 // pred_region
      %25 = vsyncadd [#allocation6], 0
      %s26 = sshll.u32 %s1, 4
      %s27 = int_to_ptr.hbm [resolvable:$true] %s26
      %s28 = sshll.u32 [#allocation5], 4
      %s29 = int_to_ptr.vmem [resolvable:$true] %s28
      %34 = dma.hbm_to_vmem [thread:$0]  %s27, 1664, %s29, [#allocation6], 128, 128, 8
    $region9: #{tpu_custom_call.1} parent=1 // pred_fallthru
      _
    // Predicated region
    $region10: #{tpu_custom_call.1} parent=1 // pred_check
      _
    $region11: #{tpu_custom_call.1} parent=1 // pred_check_branch
      %36 = sbr.rel (0) target = $region13
    $region12: #{tpu_custom_call.1} parent=1 // pred_region
      _
    $region13: #{tpu_custom_call.1} parent=1 // pred_fallthru
      _
    // Predicated region
    $region14: #{tpu_custom_call.1} parent=1 // pred_check
      _
    $region15: #{tpu_custom_call.1} parent=1 // pred_check_branch
      %38 = sbr.rel (0) target = $region17
    $region16: #{tpu_custom_call.1} parent=1 // pred_region
      %40 = dma.done [#allocation3], 128
    $region17: #{tpu_custom_call.1} parent=1 // pred_fallthru
      _
    // Predicated region
    $region18: #{tpu_custom_call.1} parent=1 // pred_check
      _
    $region19: #{tpu_custom_call.1} parent=1 // pred_check_branch
      %42 = sbr.rel (0) target = $region21
    $region20: #{tpu_custom_call.1} parent=1 // pred_region
      %44 = dma.done [#allocation6], 1664
    $region21: #{tpu_custom_call.1} parent=1 // pred_fallthru
      _
    %v45 = vld [vmem:[#allocation2] sm:$0xff]
    %v46 = vld [vmem:[#allocation5] sm:$0xff]
    %v47 = vld [vmem:[#allocation5 + $0x8] sm:$0xff]
    %v48 = vld [vmem:[#allocation5 + $0x10] sm:$0xff]
    %v49 = vld [vmem:[#allocation5 + $0x18] sm:$0xff]
    %v50 = vld [vmem:[#allocation5 + $0x20] sm:$0xff]
    %v51 = vld [vmem:[#allocation5 + $0x28] sm:$0xff]
    %v52 = vld [vmem:[#allocation5 + $0x30] sm:$0xff]
    %v53 = vld [vmem:[#allocation5 + $0x38] sm:$0xff]
    %v54 = vld [vmem:[#allocation5 + $0x40] sm:$0xff]
    %v55 = vld [vmem:[#allocation5 + $0x48] sm:$0xff]
    %v56 = vld [vmem:[#allocation5 + $0x50] sm:$0xff]
    %v57 = vld [vmem:[#allocation5 + $0x58] sm:$0xff]
    %v58 = vld [vmem:[#allocation5 + $0x60] sm:$0xf]
    %v59 = vld [vmem:[%s2] sm:$0x1]
    %v61 = vperm.slane %v59, 0
    %vm63 = vcmask 818176
    %v65 = vsel %vm63, %v45, 0
    %vm67 = vcmask 1043456
    %v69 = vsel %vm67, %v58, 0
    %71 = vmatpush.msra.mxu0 0.0
    %72 = vmatpush.msra.mxu0 0.0
    %73 = vmatpush.msra.mxu0 0.0
    %74 = vmatpush.msra.mxu0 %v69
    %75 = vmatpush.msra.mxu0 %v57
    %76 = vmatpush.msra.mxu0 %v56
    %77 = vmatpush.msra.mxu0 %v55
    %78 = vmatpush.msra.mxu0 %v54
    %79 = vmatpush.msra.mxu0 %v53
    %80 = vmatpush.msra.mxu0 %v52
    %81 = vmatpush.msra.mxu0 %v51
    %82 = vmatpush.msra.mxu0 %v50
    %83 = vmatpush.msra.mxu0 %v49
    %84 = vmatpush.msra.mxu0 %v48
    %85 = vmatpush.msra.mxu0 %v47
    %86 = vmatpush.msra.mxu0 %v46
    %87 = vmatmul.f32.gmra.mxu0 %v65
    %v88 = vpop.f32.mrf.mxu0
    %v89 = vadd.f32 %v61, %v88
    %90 = vdwg.mxu0
    %91 = vst [vmem:[#allocation7] sm:$0xff] %v89
    // Predicated region
    $region22: #{tpu_custom_call.1} parent=1 // pred_check
      _
    $region23: #{tpu_custom_call.1} parent=1 // pred_check_branch
      %93 = sbr.rel (0) target = $region25
    $region24: #{tpu_custom_call.1} parent=1 // pred_region
      %95 = vsyncadd [#allocation4], 0
      %s97 = sshll.u32 [#allocation7], 4
      %s98 = int_to_ptr.vmem [resolvable:$true] %s97
      %s99 = sshll.u32 %s3, 4
      %s100 = int_to_ptr.hbm [resolvable:$true] %s99
      %102 = dma.vmem_to_hbm [thread:$0]  %s98, 128, %s100, [#allocation4]
    $region25: #{tpu_custom_call.1} parent=1 // pred_fallthru
      _
    // Predicated region
    $region26: #{tpu_custom_call.1} parent=1 // pred_check
      _
    $region27: #{tpu_custom_call.1} parent=1 // pred_check_branch
      %104 = sbr.rel (0) target = $region29
    $region28: #{tpu_custom_call.1} parent=1 // pred_region
      %106 = dma.done [#allocation4], 128
    $region29: #{tpu_custom_call.1} parent=1 // pred_fallthru
      _
    %107 = vsyncpa [#allocation3], 1
    %108 = vsyncpa [#allocation6], 1
    %109 = vsyncpa [#allocation4], 1

</llo_original>
